<compile_context>
chip_gen: v7x
topology: tpu7x:2x2x1
jax: 0.10.0
libtpu: 0.0.40
codegen_flags: <defaults>
</compile_context>

<pallas_src>
import functools
import math

import jax
import jax.numpy as jnp
from jax.experimental import pallas as pl
from jax.experimental.pallas import tpu as pltpu


def _mlp_kernel(state_ref, action_ref,
                w0s_ref, w0a_ref, b0_ref,
                w1x_ref, w1a_ref, b1_ref,
                wh_ref, bh_ref,
                out_ref,
                *, layer0_on_vpu, act_dtype):
    """One batch tile; batch is the lane axis (all tensors are [feature, TB]).

      z0  = W0s @ x  + w0a (x) a + b0      -> [H0, TB]
      h0  = tanh(z0)
      z1  = W1x @ h0 + w1a (x) a + b1      -> [H1, TB]
      h1  = tanh(z1)
      out = sigmoid( sum_h(h1 * wh_col) + bh )  -> [1, TB]  (lane-dense store)
    """
    a = action_ref[...]                                      # [1, TB] f32

    # ---- layer 0: start from bias + action outer product (pure VPU) -------
    z0 = w0a_ref[...] * a + b0_ref[...]                      # [H0, TB] f32
    if layer0_on_vpu:
        # K = S is tiny (e.g. 4): S broadcast FMAs beat an MXU push that would
        # use only S/256 of the systolic depth.
        x = state_ref[...].astype(jnp.float32)               # [S, TB]
        w0s = w0s_ref[...].astype(jnp.float32)                # [H0, S]
        for s in range(x.shape[0]):                           # static unroll
            z0 = z0 + w0s[:, s:s + 1] * x[s:s + 1, :]
    else:
        z0 = z0 + jnp.dot(w0s_ref[...], state_ref[...],
                          preferred_element_type=jnp.float32)
    h0 = jnp.tanh(z0.astype(act_dtype))                       # [H0, TB]

    # ---- layer 1: 32x32 contraction with N = TB -> keep on the MXU ---------
    z1 = jnp.dot(w1x_ref[...], h0.astype(w1x_ref.dtype),
                 preferred_element_type=jnp.float32)
    z1 = z1 + w1a_ref[...] * a + b1_ref[...]
    h1 = jnp.tanh(z1.astype(act_dtype)).astype(jnp.float32)   # [H1, TB]

    # ---- head (out dim 1): VPU multiply + sublane (XLU) reduction ----------
    logits = jnp.sum(h1 * wh_ref[...], axis=0, keepdims=True) + bh_ref[...]
    out_ref[...] = jax.nn.sigmoid(logits)                     # [1, TB]


def uncertainty_nn3_forward(state, action, params, *,
                            matmul_dtype=jnp.bfloat16,
                            activation_dtype=jnp.float32,
                            batch_tile=None):
    """Pallas TPU forward.  state: [B, S] f32, action: [B, 1] f32 -> [B, 1].

    activation_dtype=jnp.bfloat16 doubles tanh/sigmoid (EUP) throughput on
    v6e/v7x; keep f32 on v5e (no bf16 VPU/EUP) and re-validate tolerances.
    """
    (w0s, w0a, b0, w1x, w1a, b1, wh, bh) = params
    B, S = state.shape
    H0 = w0s.shape[0]
    H1 = w1x.shape[0]
    action = action.reshape(B, 1)

    # --- batch tile = lane dimension inside the kernel ----------------------
    # TODO(synk): mask the ragged last tile via scalar prefetch + pl.when
    # instead of padding, and for the real workload (B=8 per call) batch many
    # rollout steps / ensemble members into one call before tuning further.
    if batch_tile is None:
        TB = B if B <= 128 else (128 if B <= 512 else 256)
    else:
        TB = batch_tile
    if TB >= B:
        TB, pad = B, 0                      # single full-width tile, no pad
    else:
        TB = max(128, (TB // 128) * 128)    # lane-tiling constraint
        pad = (-B) % TB
    Bp = B + pad
    num_tiles = Bp // TB

    layer0_on_vpu = S <= 8

    # --- wrapper-side layout / dtype plumbing --------------------------------
    # Batch goes on the lane axis; state is the only per-row streamed input,
    # so cast it to the matmul dtype here (halves its HBM->VMEM DMA bytes).
    state_t = state.T.astype(matmul_dtype)                    # [S, B]
    action_t = action.astype(jnp.float32).T                   # [1, B]
    if pad:
        state_t = jnp.pad(state_t, ((0, 0), (0, pad)))
        action_t = jnp.pad(action_t, ((0, 0), (0, pad)))

    w0s_m = w0s if layer0_on_vpu else w0s.astype(matmul_dtype)
    w1x_m = w1x.astype(matmul_dtype)

    def weight_spec(arr):
        return pl.BlockSpec(arr.shape, lambda i: (0, 0))      # VMEM-resident

    flops = 2 * Bp * (S * H0 + H0 * H1 + H1)
    transcendentals = Bp * (H0 + H1 + 1)                      # tanh,tanh,sigmoid
    bytes_accessed = (state_t.nbytes + action_t.nbytes + w0s_m.nbytes
                      + w0a.nbytes + b0.nbytes + w1x_m.nbytes + w1a.nbytes
                      + b1.nbytes + wh.nbytes + bh.nbytes + Bp * 4)

    kernel = functools.partial(_mlp_kernel,
                               layer0_on_vpu=layer0_on_vpu,
                               act_dtype=activation_dtype)

    out = pl.pallas_call(
        kernel,
        out_shape=jax.ShapeDtypeStruct((1, Bp), jnp.float32),
        grid=(num_tiles,),
        in_specs=[
            pl.BlockSpec((S, TB), lambda i: (0, i)),          # state_t (stream)
            pl.BlockSpec((1, TB), lambda i: (0, i)),          # action_t (stream)
            weight_spec(w0s_m), weight_spec(w0a), weight_spec(b0),
            weight_spec(w1x_m), weight_spec(w1a), weight_spec(b1),
            weight_spec(wh), weight_spec(bh),
        ],
        out_specs=pl.BlockSpec((1, TB), lambda i: (0, i)),    # lane-dense row
        compiler_params=pltpu.CompilerParams(
            dimension_semantics=("parallel",)),
        cost_estimate=pl.CostEstimate(flops=flops,
                                      transcendentals=transcendentals,
                                      bytes_accessed=bytes_accessed),
    )(state_t, action_t, w0s_m, w0a, b0, w1x_m, w1a, b1, wh, bh)

    return out[0, :B].reshape(B, 1)


def init_params(key, state_size, layers_features):
    """nn.Linear-style init (uniform +/- 1/sqrt(fan_in)) in native [out, in]
    layout, with the action column split off and the head kept as a column."""
    action_size = 1
    h0, h1 = layers_features
    k = jax.random.split(key, 6)

    def linear(kw, kb, fan_in, fan_out):
        bound = 1.0 / math.sqrt(fan_in)
        w = jax.random.uniform(kw, (fan_out, fan_in), jnp.float32, -bound, bound)
        b = jax.random.uniform(kb, (fan_out,), jnp.float32, -bound, bound)
        return w, b

    w0, b0 = linear(k[0], k[1], state_size + action_size, h0)
    w0s, w0a = w0[:, :state_size], w0[:, state_size:]          # [h0,S], [h0,1]
    b0 = b0.reshape(h0, 1)

    w1, b1 = linear(k[2], k[3], h0 + action_size, h1)
    w1x, w1a = w1[:, :h0], w1[:, h0:]                          # [h1,h0], [h1,1]
    b1 = b1.reshape(h1, 1)

    wh, bh = linear(k[4], k[5], h1, 1)                         # wh: [1, h1]
    wh = wh.T                                                  # [h1, 1] column
    bh = bh.reshape(1, 1)

    return (w0s, w0a, b0, w1x, w1a, b1, wh, bh)


def reference_forward(state, action, params):
    """Pure-JAX f32 reference matching the PyTorch module."""
    (w0s, w0a, b0, w1x, w1a, b1, wh, bh) = params
    h0 = jnp.tanh(state @ w0s.T + action @ w0a.T + b0.T)
    h1 = jnp.tanh(h0 @ w1x.T + action @ w1a.T + b1.T)
    return jax.nn.sigmoid(h1 @ wh + bh)


if __name__ == "__main__":
    # Shapes implied by the module: state (B, state_size), action flattened to
    # (B, 1), two fc layers of 32 features each, sigmoid scalar head.
    B, state_size = 8, 4
    layers_features = [32, 32]

    key = jax.random.PRNGKey(0)
    k_state, k_action, k_params, k_big = jax.random.split(key, 4)

    state = jax.random.normal(k_state, (B, state_size), dtype=jnp.float32)
    action = jax.random.randint(k_action, (B, 1), 0, 4).astype(jnp.float32)

    params = init_params(k_params, state_size, layers_features)
    ref = reference_forward(state, action, params)

    # Exact-precision run (f32 everywhere) — tight check vs reference.
    out_f32 = uncertainty_nn3_forward(state, action, params,
                                      matmul_dtype=jnp.float32)
    out_f32 = jax.block_until_ready(out_f32)
    assert out_f32.shape == (B, 1)
    assert jnp.allclose(out_f32, ref, atol=1e-5, rtol=1e-5), "f32 mismatch"

    # Mixed precision (bf16 streamed state / MXU weights, f32 accumulation).
    out_bf16 = uncertainty_nn3_forward(state, action, params,
                                       matmul_dtype=jnp.bfloat16)
    out_bf16 = jax.block_until_ready(out_bf16)
    assert out_bf16.shape == (B, 1)
    assert jnp.allclose(out_bf16, ref, atol=2e-2, rtol=0), "bf16 mismatch"

    # Larger ragged batch: exercises the multi-tile (128-lane) + padding path.
    B2 = 300
    kb_s, kb_a = jax.random.split(k_big)
    state2 = jax.random.normal(kb_s, (B2, state_size), dtype=jnp.float32)
    action2 = jax.random.randint(kb_a, (B2, 1), 0, 4).astype(jnp.float32)
    ref2 = reference_forward(state2, action2, params)
    out2 = jax.block_until_ready(
        uncertainty_nn3_forward(state2, action2, params,
                                matmul_dtype=jnp.float32))
    assert out2.shape == (B2, 1)
    assert jnp.allclose(out2, ref2, atol=1e-5, rtol=1e-5), "tiled f32 mismatch"

    print("KERNEL_OK")
</pallas_src>

<mosaic_0001>
module attributes {stable_mosaic.version = 11 : i64} {
  func.func @_mlp_kernel(%arg0: i32, %arg1: memref<4x8xf32, #tpu.memory_space<vmem>>, %arg2: memref<1x8xf32, #tpu.memory_space<vmem>>, %arg3: memref<32x4xf32, #tpu.memory_space<vmem>>, %arg4: memref<32x1xf32, #tpu.memory_space<vmem>>, %arg5: memref<32x1xf32, #tpu.memory_space<vmem>>, %arg6: memref<32x32xf32, #tpu.memory_space<vmem>>, %arg7: memref<32x1xf32, #tpu.memory_space<vmem>>, %arg8: memref<32x1xf32, #tpu.memory_space<vmem>>, %arg9: memref<32x1xf32, #tpu.memory_space<vmem>>, %arg10: memref<1x1xf32, #tpu.memory_space<vmem>>, %arg11: memref<1x8xf32, #tpu.memory_space<vmem>>) attributes {dimension_semantics = [#tpu.dimension_semantics<parallel>], iteration_bounds = array<i64: 1>, scalar_prefetch = 0 : i64, scratch_operands = 0 : i64, tpu.core_type = #tpu.core_type<tc>, window_params = [{transform_indices = @transform_0, window_bounds = array<i64: 4, 8>}, {transform_indices = @transform_1, window_bounds = array<i64: 1, 8>}, {pipeline_mode = #tpu.pipeline_mode<synchronous>, transform_indices = @transform_2, window_bounds = array<i64: 32, 4>}, {pipeline_mode = #tpu.pipeline_mode<synchronous>, transform_indices = @transform_3, window_bounds = array<i64: 32, 1>}, {pipeline_mode = #tpu.pipeline_mode<synchronous>, transform_indices = @transform_4, window_bounds = array<i64: 32, 1>}, {pipeline_mode = #tpu.pipeline_mode<synchronous>, transform_indices = @transform_5, window_bounds = array<i64: 32, 32>}, {pipeline_mode = #tpu.pipeline_mode<synchronous>, transform_indices = @transform_6, window_bounds = array<i64: 32, 1>}, {pipeline_mode = #tpu.pipeline_mode<synchronous>, transform_indices = @transform_7, window_bounds = array<i64: 32, 1>}, {pipeline_mode = #tpu.pipeline_mode<synchronous>, transform_indices = @transform_8, window_bounds = array<i64: 32, 1>}, {pipeline_mode = #tpu.pipeline_mode<synchronous>, transform_indices = @transform_9, window_bounds = array<i64: 1, 1>}, {transform_indices = @transform_10, window_bounds = array<i64: 1, 8>}]} {
    %c0 = arith.constant 0 : index
    %c0_0 = arith.constant 0 : index
    %0 = vector.load %arg2[%c0, %c0_0] : memref<1x8xf32, #tpu.memory_space<vmem>>, vector<1x8xf32>
    %c0_1 = arith.constant 0 : index
    %c0_2 = arith.constant 0 : index
    %1 = vector.load %arg4[%c0_1, %c0_2] : memref<32x1xf32, #tpu.memory_space<vmem>>, vector<32x1xf32>
    %2 = vector.broadcast %1 : vector<32x1xf32> to vector<32x8xf32>
    %3 = vector.broadcast %0 : vector<1x8xf32> to vector<32x8xf32>
    %4 = arith.mulf %2, %3 : vector<32x8xf32>
    %c0_3 = arith.constant 0 : index
    %c0_4 = arith.constant 0 : index
    %5 = vector.load %arg5[%c0_3, %c0_4] : memref<32x1xf32, #tpu.memory_space<vmem>>, vector<32x1xf32>
    %6 = vector.broadcast %5 : vector<32x1xf32> to vector<32x8xf32>
    %7 = arith.addf %4, %6 : vector<32x8xf32>
    %c0_5 = arith.constant 0 : index
    %c0_6 = arith.constant 0 : index
    %8 = vector.load %arg1[%c0_5, %c0_6] : memref<4x8xf32, #tpu.memory_space<vmem>>, vector<4x8xf32>
    %c0_7 = arith.constant 0 : index
    %c0_8 = arith.constant 0 : index
    %9 = vector.load %arg3[%c0_7, %c0_8] : memref<32x4xf32, #tpu.memory_space<vmem>>, vector<32x4xf32>
    %10 = vector.extract_strided_slice %9 {offsets = [0, 0], sizes = [32, 1], strides = [1, 1]} : vector<32x4xf32> to vector<32x1xf32>
    %11 = vector.extract_strided_slice %8 {offsets = [0, 0], sizes = [1, 8], strides = [1, 1]} : vector<4x8xf32> to vector<1x8xf32>
    %12 = vector.broadcast %10 : vector<32x1xf32> to vector<32x8xf32>
    %13 = vector.broadcast %11 : vector<1x8xf32> to vector<32x8xf32>
    %14 = arith.mulf %12, %13 : vector<32x8xf32>
    %15 = arith.addf %7, %14 : vector<32x8xf32>
    %16 = vector.extract_strided_slice %9 {offsets = [0, 1], sizes = [32, 1], strides = [1, 1]} : vector<32x4xf32> to vector<32x1xf32>
    %17 = vector.extract_strided_slice %8 {offsets = [1, 0], sizes = [1, 8], strides = [1, 1]} : vector<4x8xf32> to vector<1x8xf32>
    %18 = vector.broadcast %16 : vector<32x1xf32> to vector<32x8xf32>
    %19 = vector.broadcast %17 : vector<1x8xf32> to vector<32x8xf32>
    %20 = arith.mulf %18, %19 : vector<32x8xf32>
    %21 = arith.addf %15, %20 : vector<32x8xf32>
    %22 = vector.extract_strided_slice %9 {offsets = [0, 2], sizes = [32, 1], strides = [1, 1]} : vector<32x4xf32> to vector<32x1xf32>
    %23 = vector.extract_strided_slice %8 {offsets = [2, 0], sizes = [1, 8], strides = [1, 1]} : vector<4x8xf32> to vector<1x8xf32>
    %24 = vector.broadcast %22 : vector<32x1xf32> to vector<32x8xf32>
    %25 = vector.broadcast %23 : vector<1x8xf32> to vector<32x8xf32>
    %26 = arith.mulf %24, %25 : vector<32x8xf32>
    %27 = arith.addf %21, %26 : vector<32x8xf32>
    %28 = vector.extract_strided_slice %9 {offsets = [0, 3], sizes = [32, 1], strides = [1, 1]} : vector<32x4xf32> to vector<32x1xf32>
    %29 = vector.extract_strided_slice %8 {offsets = [3, 0], sizes = [1, 8], strides = [1, 1]} : vector<4x8xf32> to vector<1x8xf32>
    %30 = vector.broadcast %28 : vector<32x1xf32> to vector<32x8xf32>
    %31 = vector.broadcast %29 : vector<1x8xf32> to vector<32x8xf32>
    %32 = arith.mulf %30, %31 : vector<32x8xf32>
    %33 = arith.addf %27, %32 : vector<32x8xf32>
    %34 = math.tanh %33 : vector<32x8xf32>
    %c0_9 = arith.constant 0 : index
    %c0_10 = arith.constant 0 : index
    %35 = vector.load %arg6[%c0_9, %c0_10] : memref<32x32xf32, #tpu.memory_space<vmem>>, vector<32x32xf32>
    %cst = arith.constant dense<0.000000e+00> : vector<32x8xf32>
    %36 = tpu.matmul %35, %34, %cst {dimension_numbers = #tpu.dot_dimension_numbers<[1], [0], [0], [1], [0, 0, 1, 1], [], []>} : vector<32x32xf32>, vector<32x8xf32>, vector<32x8xf32> -> vector<32x8xf32>
    %c0_11 = arith.constant 0 : index
    %c0_12 = arith.constant 0 : index
    %37 = vector.load %arg7[%c0_11, %c0_12] : memref<32x1xf32, #tpu.memory_space<vmem>>, vector<32x1xf32>
    %38 = vector.broadcast %37 : vector<32x1xf32> to vector<32x8xf32>
    %39 = vector.broadcast %0 : vector<1x8xf32> to vector<32x8xf32>
    %40 = arith.mulf %38, %39 : vector<32x8xf32>
    %41 = arith.addf %36, %40 : vector<32x8xf32>
    %c0_13 = arith.constant 0 : index
    %c0_14 = arith.constant 0 : index
    %42 = vector.load %arg8[%c0_13, %c0_14] : memref<32x1xf32, #tpu.memory_space<vmem>>, vector<32x1xf32>
    %43 = vector.broadcast %42 : vector<32x1xf32> to vector<32x8xf32>
    %44 = arith.addf %41, %43 : vector<32x8xf32>
    %45 = math.tanh %44 : vector<32x8xf32>
    %c0_15 = arith.constant 0 : index
    %c0_16 = arith.constant 0 : index
    %46 = vector.load %arg9[%c0_15, %c0_16] : memref<32x1xf32, #tpu.memory_space<vmem>>, vector<32x1xf32>
    %47 = vector.broadcast %46 : vector<32x1xf32> to vector<32x8xf32>
    %48 = arith.mulf %45, %47 : vector<32x8xf32>
    %cst_17 = arith.constant dense<0.000000e+00> : vector<8xf32>
    %49 = vector.multi_reduction <add>, %48, %cst_17 [0] : vector<32x8xf32> to vector<8xf32>
    %50 = vector.shape_cast %49 : vector<8xf32> to vector<1x8xf32>
    %c0_18 = arith.constant 0 : index
    %c0_19 = arith.constant 0 : index
    %51 = vector.load %arg10[%c0_18, %c0_19] : memref<1x1xf32, #tpu.memory_space<vmem>>, vector<1x1xf32>
    %52 = vector.broadcast %51 : vector<1x1xf32> to vector<1x8xf32>
    %53 = arith.addf %50, %52 : vector<1x8xf32>
    %54 = arith.negf %53 : vector<1x8xf32>
    %55 = math.exp %54 : vector<1x8xf32>
    %cst_20 = arith.constant 1.000000e+00 : f32
    %56 = vector.broadcast %cst_20 : f32 to vector<1x8xf32>
    %57 = arith.addf %56, %55 : vector<1x8xf32>
    %58 = arith.divf %56, %57 : vector<1x8xf32>
    %c0_21 = arith.constant 0 : index
    %c0_22 = arith.constant 0 : index
    %59 = vector.load %arg11[%c0_21, %c0_22] : memref<1x8xf32, #tpu.memory_space<vmem>>, vector<1x8xf32>
    tpu.vector_store %arg11[%c0_21, %c0_22], %58 {strides = array<i32>} : memref<1x8xf32, #tpu.memory_space<vmem>>, vector<1x8xf32>,
    return
  }
  func.func @transform_0(%arg0: i32) -> (i32, i32) {
    %c0_i32 = arith.constant 0 : i32
    %c0_i32_0 = arith.constant 0 : i32
    return %c0_i32, %arg0 : i32, i32
  }
  func.func @transform_1(%arg0: i32) -> (i32, i32) {
    %c0_i32 = arith.constant 0 : i32
    %c0_i32_0 = arith.constant 0 : i32
    return %c0_i32, %arg0 : i32, i32
  }
  func.func @transform_2(%arg0: i32) -> (i32, i32) {
    %c0_i32 = arith.constant 0 : i32
    %c0_i32_0 = arith.constant 0 : i32
    %c0_i32_1 = arith.constant 0 : i32
    return %c0_i32, %c0_i32_0 : i32, i32
  }
  func.func @transform_3(%arg0: i32) -> (i32, i32) {
    %c0_i32 = arith.constant 0 : i32
    %c0_i32_0 = arith.constant 0 : i32
    %c0_i32_1 = arith.constant 0 : i32
    return %c0_i32, %c0_i32_0 : i32, i32
  }
  func.func @transform_4(%arg0: i32) -> (i32, i32) {
    %c0_i32 = arith.constant 0 : i32
    %c0_i32_0 = arith.constant 0 : i32
    %c0_i32_1 = arith.constant 0 : i32
    return %c0_i32, %c0_i32_0 : i32, i32
  }
  func.func @transform_5(%arg0: i32) -> (i32, i32) {
    %c0_i32 = arith.constant 0 : i32
    %c0_i32_0 = arith.constant 0 : i32
    %c0_i32_1 = arith.constant 0 : i32
    return %c0_i32, %c0_i32_0 : i32, i32
  }
  func.func @transform_6(%arg0: i32) -> (i32, i32) {
    %c0_i32 = arith.constant 0 : i32
    %c0_i32_0 = arith.constant 0 : i32
    %c0_i32_1 = arith.constant 0 : i32
    return %c0_i32, %c0_i32_0 : i32, i32
  }
  func.func @transform_7(%arg0: i32) -> (i32, i32) {
    %c0_i32 = arith.constant 0 : i32
    %c0_i32_0 = arith.constant 0 : i32
    %c0_i32_1 = arith.constant 0 : i32
    return %c0_i32, %c0_i32_0 : i32, i32
  }
  func.func @transform_8(%arg0: i32) -> (i32, i32) {
    %c0_i32 = arith.constant 0 : i32
    %c0_i32_0 = arith.constant 0 : i32
    %c0_i32_1 = arith.constant 0 : i32
    return %c0_i32, %c0_i32_0 : i32, i32
  }
  func.func @transform_9(%arg0: i32) -> (i32, i32) {
    %c0_i32 = arith.constant 0 : i32
    %c0_i32_0 = arith.constant 0 : i32
    %c0_i32_1 = arith.constant 0 : i32
    return %c0_i32, %c0_i32_0 : i32, i32
  }
  func.func @transform_10(%arg0: i32) -> (i32, i32) {
    %c0_i32 = arith.constant 0 : i32
    %c0_i32_0 = arith.constant 0 : i32
    return %c0_i32, %arg0 : i32, i32
  }
}

</mosaic_0001>

<llo_original>
// kernel: tpu_custom_call.1
$region0: #{tpu_custom_call.1}
  #allocation0 [shape = 'u32[]', space=smem, size = 0x4, offset = 0x4, fixed_abs, tag = 'smem constant byte address 0x4 - core index']
  #allocation1 [shape = 'u32[144,128]{1,0:T(1,128)}', space=vmem, size = 0x12000, scoped, tag = 'internal scratch']
  #allocation2 [shape = 'f32[1,1]{1,0:T(1,128)S(1)}', space=vmem, size = 0x200, scoped, tag = 'scoped memory for tpu_custom_call.1']
  %s0 = inlined_call_operand.vmem [shape: f32[4,8], index: 0, kind: input, shape index: {}]
  %s1 = inlined_call_operand.vmem [shape: f32[1,8], index: 1, kind: input, shape index: {}]
  %s2 = inlined_call_operand.vmem [shape: f32[32,4], index: 2, kind: input, shape index: {}]
  %s3 = inlined_call_operand.vmem [shape: f32[32,1], index: 3, kind: input, shape index: {}]
  %s4 = inlined_call_operand.vmem [shape: f32[32,1], index: 4, kind: input, shape index: {}]
  %s5 = inlined_call_operand.vmem [shape: f32[32,32], index: 5, kind: input, shape index: {}]
  %s6 = inlined_call_operand.vmem [shape: f32[32,1], index: 6, kind: input, shape index: {}]
  %s7 = inlined_call_operand.vmem [shape: f32[32,1], index: 7, kind: input, shape index: {}]
  %s8 = inlined_call_operand.vmem [shape: f32[32,1], index: 8, kind: input, shape index: {}]
  %s9 = inlined_call_operand.<no memory space> [shape: f32[1,1], index: 9, kind: input, shape index: {}]
  %s10 = inlined_call_operand.hbm [shape: f32[1,8], index: 10, kind: output, shape index: {}]
  %s11 = sld [smem:[#allocation0]]
  $region50: #{tpu_custom_call.1} parent=0
    _
  %s13 = ssub.s32 1, %s11
  %s14 = scalar_select 0, %s13, %s11
  %v15 = vstv %s9
  %16 = vst [vmem:[#allocation2] sm:$0x1] %v15
  $region1: #{tpu_custom_call.1} parent=0
    #allocation3 [shape = 'u8[512]{0}', space=vmem, size = 0x400, scoped, tag = 'output window, operand 0, single buffered']
    #allocation4 [shape = 's32[1]{0}', space=sflag, size = 0x4, scoped, tag = 'scoped memory for tpu_custom_call.1']
    %17 = vsyncpa [#allocation4], 0
    // Predicated region
    $region2: #{tpu_custom_call.1} parent=1 // pred_check
      _
    $region3: #{tpu_custom_call.1} parent=1 // pred_check_branch
      %19 = sbr.rel (0) target = $region5
    $region4: #{tpu_custom_call.1} parent=1 // pred_region
      _
    $region5: #{tpu_custom_call.1} parent=1 // pred_fallthru
      _
    // Predicated region
    $region6: #{tpu_custom_call.1} parent=1 // pred_check
      _
    $region7: #{tpu_custom_call.1} parent=1 // pred_check_branch
      %21 = sbr.rel (0) target = $region9
    $region8: #{tpu_custom_call.1} parent=1 // pred_region
      _
    $region9: #{tpu_custom_call.1} parent=1 // pred_fallthru
      _
    // Predicated region
    $region10: #{tpu_custom_call.1} parent=1 // pred_check
      _
    $region11: #{tpu_custom_call.1} parent=1 // pred_check_branch
      %23 = sbr.rel (0) target = $region13
    $region12: #{tpu_custom_call.1} parent=1 // pred_region
      _
    $region13: #{tpu_custom_call.1} parent=1 // pred_fallthru
      _
    // Predicated region
    $region14: #{tpu_custom_call.1} parent=1 // pred_check
      _
    $region15: #{tpu_custom_call.1} parent=1 // pred_check_branch
      %25 = sbr.rel (0) target = $region17
    $region16: #{tpu_custom_call.1} parent=1 // pred_region
      _
    $region17: #{tpu_custom_call.1} parent=1 // pred_fallthru
      _
    // Predicated region
    $region18: #{tpu_custom_call.1} parent=1 // pred_check
      _
    $region19: #{tpu_custom_call.1} parent=1 // pred_check_branch
      %27 = sbr.rel (0) target = $region21
    $region20: #{tpu_custom_call.1} parent=1 // pred_region
      _
    $region21: #{tpu_custom_call.1} parent=1 // pred_fallthru
      _
    // Predicated region
    $region22: #{tpu_custom_call.1} parent=1 // pred_check
      _
    $region23: #{tpu_custom_call.1} parent=1 // pred_check_branch
      %29 = sbr.rel (0) target = $region25
    $region24: #{tpu_custom_call.1} parent=1 // pred_region
      _
    $region25: #{tpu_custom_call.1} parent=1 // pred_fallthru
      _
    // Predicated region
    $region26: #{tpu_custom_call.1} parent=1 // pred_check
      _
    $region27: #{tpu_custom_call.1} parent=1 // pred_check_branch
      %31 = sbr.rel (0) target = $region29
    $region28: #{tpu_custom_call.1} parent=1 // pred_region
      _
    $region29: #{tpu_custom_call.1} parent=1 // pred_fallthru
      _
    // Predicated region
    $region30: #{tpu_custom_call.1} parent=1 // pred_check
      _
    $region31: #{tpu_custom_call.1} parent=1 // pred_check_branch
      %33 = sbr.rel (0) target = $region33
    $region32: #{tpu_custom_call.1} parent=1 // pred_region
      _
    $region33: #{tpu_custom_call.1} parent=1 // pred_fallthru
      _
    // Predicated region
    $region34: #{tpu_custom_call.1} parent=1 // pred_check
      _
    $region35: #{tpu_custom_call.1} parent=1 // pred_check_branch
      %35 = sbr.rel (0) target = $region37
    $region36: #{tpu_custom_call.1} parent=1 // pred_region
      _
    $region37: #{tpu_custom_call.1} parent=1 // pred_fallthru
      _
    // Predicated region
    $region38: #{tpu_custom_call.1} parent=1 // pred_check
      _
    $region39: #{tpu_custom_call.1} parent=1 // pred_check_branch
      %37 = sbr.rel (0) target = $region41
    $region40: #{tpu_custom_call.1} parent=1 // pred_region
      _
    $region41: #{tpu_custom_call.1} parent=1 // pred_fallthru
      _
    %v38 = vld [vmem:[%s1] sm:$0x1]
    %v39 = vld [vmem:[%s3] sm:$0xff]
    %v40 = vld [vmem:[%s3 + $0x8] sm:$0xff]
    %v41 = vld [vmem:[%s3 + $0x10] sm:$0xff]
    %v42 = vld [vmem:[%s3 + $0x18] sm:$0xff]
    %44 = vset.pattern.permute.xlu0 0
    %45 = vperm.xlu0 %44, %v39
    %v46 = vpop.permute.xlu0 %45
    %49 = vset.pattern.permute.xlu0 0
    %50 = vperm.xlu0 %49, %v40
    %v51 = vpop.permute.xlu0 %50
    %54 = vset.pattern.permute.xlu0 0
    %55 = vperm.xlu0 %54, %v41
    %v56 = vpop.permute.xlu0 %55
    %59 = vset.pattern.permute.xlu0 0
    %60 = vperm.xlu0 %59, %v42
    %v61 = vpop.permute.xlu0 %60
    %v64 = vlaneseq
    %v65 = vshrl.u32 %v64, 7
    %v66 = vsub.s32 0, %v65
    %v67 = vrot.slane %v38, %v66
    %v69 = vmul.f32 %v46, %v67
    %v70 = vmul.f32 %v51, %v67
    %v71 = vmul.f32 %v56, %v67
    %v72 = vmul.f32 %v61, %v67
    %v73 = vld [vmem:[%s4] sm:$0xff]
    %v74 = vld [vmem:[%s4 + $0x8] sm:$0xff]
    %v75 = vld [vmem:[%s4 + $0x10] sm:$0xff]
    %v76 = vld [vmem:[%s4 + $0x18] sm:$0xff]
    %78 = vset.pattern.permute.xlu0 0
    %79 = vperm.xlu0 %78, %v73
    %v80 = vpop.permute.xlu0 %79
    %83 = vset.pattern.permute.xlu0 0
    %84 = vperm.xlu0 %83, %v74
    %v85 = vpop.permute.xlu0 %84
    %88 = vset.pattern.permute.xlu0 0
    %89 = vperm.xlu0 %88, %v75
    %v90 = vpop.permute.xlu0 %89
    %93 = vset.pattern.permute.xlu0 0
    %94 = vperm.xlu0 %93, %v76
    %v95 = vpop.permute.xlu0 %94
    %v97 = vadd.f32 %v69, %v80
    %v98 = vadd.f32 %v70, %v85
    %v99 = vadd.f32 %v71, %v90
    %v100 = vadd.f32 %v72, %v95
    %v101 = vld [vmem:[%s0] sm:$0xf]
    %v102 = vld [vmem:[%s2] sm:$0xff]
    %v103 = vld [vmem:[%s2 + $0x8] sm:$0xff]
    %v104 = vld [vmem:[%s2 + $0x10] sm:$0xff]
    %v105 = vld [vmem:[%s2 + $0x18] sm:$0xff]
    %107 = vset.pattern.permute.xlu0 0
    %108 = vperm.xlu0 %107, %v102
    %v109 = vpop.permute.xlu0 %108
    %112 = vset.pattern.permute.xlu0 0
    %113 = vperm.xlu0 %112, %v103
    %v114 = vpop.permute.xlu0 %113
    %117 = vset.pattern.permute.xlu0 0
    %118 = vperm.xlu0 %117, %v104
    %v119 = vpop.permute.xlu0 %118
    %122 = vset.pattern.permute.xlu0 0
    %123 = vperm.xlu0 %122, %v105
    %v124 = vpop.permute.xlu0 %123
    %v126 = vlaneseq
    %v127 = vshrl.u32 %v126, 7
    %v128 = vsub.s32 0, %v127
    %v129 = vrot.slane %v101, %v128
    %v130 = vmul.f32 %v109, %v129
    %v131 = vmul.f32 %v114, %v129
    %v132 = vmul.f32 %v119, %v129
    %v133 = vmul.f32 %v124, %v129
    %v134 = vadd.f32 %v97, %v130
    %v135 = vadd.f32 %v98, %v131
    %v136 = vadd.f32 %v99, %v132
    %v137 = vadd.f32 %v100, %v133
    %138 = vset.pattern.permute.xlu0 1
    %139 = vperm.xlu0 %138, %v102
    %v140 = vpop.permute.xlu0 %139
    %142 = vset.pattern.permute.xlu0 1
    %143 = vperm.xlu0 %142, %v103
    %v144 = vpop.permute.xlu0 %143
    %146 = vset.pattern.permute.xlu0 1
    %147 = vperm.xlu0 %146, %v104
    %v148 = vpop.permute.xlu0 %147
    %150 = vset.pattern.permute.xlu0 1
    %151 = vperm.xlu0 %150, %v105
    %v152 = vpop.permute.xlu0 %151
    %v154 = vlaneseq
    %v155 = vshrl.u32 %v154, 7
    %v156 = vsub.s32 1, %v155
    %v157 = vrot.slane %v101, %v156
    %v158 = vmul.f32 %v140, %v157
    %v159 = vmul.f32 %v144, %v157
    %v160 = vmul.f32 %v148, %v157
    %v161 = vmul.f32 %v152, %v157
    %v162 = vadd.f32 %v134, %v158
    %v163 = vadd.f32 %v135, %v159
    %v164 = vadd.f32 %v136, %v160
    %v165 = vadd.f32 %v137, %v161
    %166 = vset.pattern.permute.xlu0 2
    %167 = vperm.xlu0 %166, %v102
    %v168 = vpop.permute.xlu0 %167
    %170 = vset.pattern.permute.xlu0 2
    %171 = vperm.xlu0 %170, %v103
    %v172 = vpop.permute.xlu0 %171
    %174 = vset.pattern.permute.xlu0 2
    %175 = vperm.xlu0 %174, %v104
    %v176 = vpop.permute.xlu0 %175
    %178 = vset.pattern.permute.xlu0 2
    %179 = vperm.xlu0 %178, %v105
    %v180 = vpop.permute.xlu0 %179
    %v182 = vlaneseq
    %v183 = vshrl.u32 %v182, 7
    %v184 = vsub.s32 2, %v183
    %v185 = vrot.slane %v101, %v184
    %v186 = vmul.f32 %v168, %v185
    %v187 = vmul.f32 %v172, %v185
    %v188 = vmul.f32 %v176, %v185
    %v189 = vmul.f32 %v180, %v185
    %v190 = vadd.f32 %v162, %v186
    %v191 = vadd.f32 %v163, %v187
    %v192 = vadd.f32 %v164, %v188
    %v193 = vadd.f32 %v165, %v189
    %194 = vset.pattern.permute.xlu0 3
    %195 = vperm.xlu0 %194, %v102
    %v196 = vpop.permute.xlu0 %195
    %198 = vset.pattern.permute.xlu0 3
    %199 = vperm.xlu0 %198, %v103
    %v200 = vpop.permute.xlu0 %199
    %202 = vset.pattern.permute.xlu0 3
    %203 = vperm.xlu0 %202, %v104
    %v204 = vpop.permute.xlu0 %203
    %206 = vset.pattern.permute.xlu0 3
    %207 = vperm.xlu0 %206, %v105
    %v208 = vpop.permute.xlu0 %207
    %v210 = vlaneseq
    %v211 = vshrl.u32 %v210, 7
    %v212 = vsub.s32 3, %v211
    %v213 = vrot.slane %v101, %v212
    %v214 = vmul.f32 %v196, %v213
    %v215 = vmul.f32 %v200, %v213
    %v216 = vmul.f32 %v204, %v213
    %v217 = vmul.f32 %v208, %v213
    %v218 = vadd.f32 %v190, %v214
    %v219 = vadd.f32 %v191, %v215
    %v220 = vadd.f32 %v192, %v216
    %v221 = vadd.f32 %v193, %v217
    %v222 = vtanh.pop %v218
    %v223 = vtanh.pop %v219
    %v224 = vtanh.pop %v220
    %v225 = vtanh.pop %v221
    %v226 = vld [vmem:[%s5] sm:$0xff]
    %v227 = vld [vmem:[%s5 + $0x8] sm:$0xff]
    %v228 = vld [vmem:[%s5 + $0x10] sm:$0xff]
    %v229 = vld [vmem:[%s5 + $0x18] sm:$0xff]
    %v230 = vld [vmem:[%s6] sm:$0xff]
    %v231 = vld [vmem:[%s6 + $0x8] sm:$0xff]
    %v232 = vld [vmem:[%s6 + $0x10] sm:$0xff]
    %v233 = vld [vmem:[%s6 + $0x18] sm:$0xff]
    %235 = vset.pattern.permute.xlu0 0
    %236 = vperm.xlu0 %235, %v230
    %v237 = vpop.permute.xlu0 %236
    %240 = vset.pattern.permute.xlu0 0
    %241 = vperm.xlu0 %240, %v231
    %v242 = vpop.permute.xlu0 %241
    %245 = vset.pattern.permute.xlu0 0
    %246 = vperm.xlu0 %245, %v232
    %v247 = vpop.permute.xlu0 %246
    %250 = vset.pattern.permute.xlu0 0
    %251 = vperm.xlu0 %250, %v233
    %v252 = vpop.permute.xlu0 %251
    %v254 = vmul.f32 %v237, %v67
    %v255 = vmul.f32 %v242, %v67
    %v256 = vmul.f32 %v247, %v67
    %v257 = vmul.f32 %v252, %v67
    %vm258 = vcmask 261120
    %v260 = vsel %vm258, %v226, 0
    %v263 = vsel %vm258, %v227, 0
    %v266 = vsel %vm258, %v228, 0
    %v269 = vsel %vm258, %v229, 0
    %271 = vmatprep.subr.mxu0 0.0
    %272 = vmatpush1.msra.mxu0 %v222
    %273 = vmatprep.subr.mxu0 0.0
    %274 = vmatpush1.msra.mxu0 %v223
    %275 = vmatprep.subr.mxu0 0.0
    %276 = vmatpush1.msra.mxu0 %v224
    %277 = vmatprep.subr.mxu0 0.0
    %278 = vmatpush1.msra.mxu0 %v225
    %279 = vmatprep.subr.mxu0 0.0
    %280 = vmatpush1.msra.mxu0 0.0
    %281 = vmatprep.subr.mxu0 0.0
    %282 = vmatpush1.msra.mxu0 0.0
    %283 = vmatprep.subr.mxu0 0.0
    %284 = vmatpush1.msra.mxu0 0.0
    %285 = vmatprep.subr.mxu0 0.0
    %286 = vmatpush1.msra.mxu0 0.0
    %287 = vmatprep.subr.mxu0 0.0
    %288 = vmatpush1.msra.mxu0 0.0
    %289 = vmatprep.subr.mxu0 0.0
    %290 = vmatpush1.msra.mxu0 0.0
    %291 = vmatprep.subr.mxu0 0.0
    %292 = vmatpush1.msra.mxu0 0.0
    %293 = vmatprep.subr.mxu0 0.0
    %294 = vmatpush1.msra.mxu0 0.0
    %295 = vmatprep.subr.mxu0 0.0
    %296 = vmatpush1.msra.mxu0 0.0
    %297 = vmatprep.subr.mxu0 0.0
    %298 = vmatpush1.msra.mxu0 0.0
    %299 = vmatprep.subr.mxu0 0.0
    %300 = vmatpush1.msra.mxu0 0.0
    %301 = vmatprep.subr.mxu0 0.0
    %302 = vmatpush1.msra.mxu0 0.0
    %303 = vmatprep.subr.mxu0 0.0
    %304 = vmatpush1.msra.mxu0 0.0
    %305 = vmatprep.subr.mxu0 0.0
    %306 = vmatpush1.msra.mxu0 0.0
    %307 = vmatprep.subr.mxu0 0.0
    %308 = vmatpush1.msra.mxu0 0.0
    %309 = vmatprep.subr.mxu0 0.0
    %310 = vmatpush1.msra.mxu0 0.0
    %311 = vmatprep.subr.mxu0 0.0
    %312 = vmatpush1.msra.mxu0 0.0
    %313 = vmatprep.subr.mxu0 0.0
    %314 = vmatpush1.msra.mxu0 0.0
    %315 = vmatprep.subr.mxu0 0.0
    %316 = vmatpush1.msra.mxu0 0.0
    %317 = vmatprep.subr.mxu0 0.0
    %318 = vmatpush1.msra.mxu0 0.0
    %319 = vmatprep.subr.mxu0 0.0
    %320 = vmatpush1.msra.mxu0 0.0
    %321 = vmatprep.subr.mxu0 0.0
    %322 = vmatpush1.msra.mxu0 0.0
    %323 = vmatprep.subr.mxu0 0.0
    %324 = vmatpush1.msra.mxu0 0.0
    %325 = vmatprep.subr.mxu0 0.0
    %326 = vmatpush1.msra.mxu0 0.0
    %327 = vmatprep.subr.mxu0 0.0
    %328 = vmatpush1.msra.mxu0 0.0
    %329 = vmatprep.subr.mxu0 0.0
    %330 = vmatpush1.msra.mxu0 0.0
    %331 = vmatprep.subr.mxu0 0.0
    %332 = vmatpush1.msra.mxu0 0.0
    %333 = vmatprep.subr.mxu0 0.0
    %334 = vmatpush1.msra.mxu0 0.0
    %335 = vmatprep.mubr.f32.mxu0 0.0
    %336 = vmatmul.mubr.f32.gmra.mrb[0].mxu0 %v260
    %v337 = vpop.f32.mrb[0].mxu0
    %v338 = vadd.f32 %v254, %v337
    %v339 = vpop.f32.mrb[0].mxu0
    %340 = vmatprep.mubr.f32.mxu0 0.0
    %341 = vmatmul.mubr.f32.gmra.mrb[0].mxu0 %v263
    %v342 = vpop.f32.mrb[0].mxu0
    %v343 = vadd.f32 %v255, %v342
    %v344 = vpop.f32.mrb[0].mxu0
    %345 = vmatprep.mubr.f32.mxu0 0.0
    %346 = vmatmul.mubr.f32.gmra.mrb[0].mxu0 %v266
    %v347 = vpop.f32.mrb[0].mxu0
    %v348 = vadd.f32 %v256, %v347
    %v349 = vpop.f32.mrb[0].mxu0
    %350 = vmatprep.mubr.f32.mxu0 0.0
    %351 = vmatmul.mubr.f32.gmra.mrb[0].mxu0 %v269
    %v352 = vpop.f32.mrb[0].mxu0
    %v353 = vadd.f32 %v257, %v352
    %v354 = vpop.f32.mrb[0].mxu0
    %355 = vdwg.mxu0
    %v356 = vld [vmem:[%s7] sm:$0xff]
    %v357 = vld [vmem:[%s7 + $0x8] sm:$0xff]
    %v358 = vld [vmem:[%s7 + $0x10] sm:$0xff]
    %v359 = vld [vmem:[%s7 + $0x18] sm:$0xff]
    %361 = vset.pattern.permute.xlu0 0
    %362 = vperm.xlu0 %361, %v356
    %v363 = vpop.permute.xlu0 %362
    %366 = vset.pattern.permute.xlu0 0
    %367 = vperm.xlu0 %366, %v357
    %v368 = vpop.permute.xlu0 %367
    %371 = vset.pattern.permute.xlu0 0
    %372 = vperm.xlu0 %371, %v358
    %v373 = vpop.permute.xlu0 %372
    %376 = vset.pattern.permute.xlu0 0
    %377 = vperm.xlu0 %376, %v359
    %v378 = vpop.permute.xlu0 %377
    %v380 = vadd.f32 %v338, %v363
    %v381 = vadd.f32 %v343, %v368
    %v382 = vadd.f32 %v348, %v373
    %v383 = vadd.f32 %v353, %v378
    %v384 = vtanh.pop %v380
    %v385 = vtanh.pop %v381
    %v386 = vtanh.pop %v382
    %v387 = vtanh.pop %v383
    %v388 = vld [vmem:[%s8] sm:$0xff]
    %v389 = vld [vmem:[%s8 + $0x8] sm:$0xff]
    %v390 = vld [vmem:[%s8 + $0x10] sm:$0xff]
    %v391 = vld [vmem:[%s8 + $0x18] sm:$0xff]
    %393 = vset.pattern.permute.xlu0 0
    %394 = vperm.xlu0 %393, %v388
    %v395 = vpop.permute.xlu0 %394
    %398 = vset.pattern.permute.xlu0 0
    %399 = vperm.xlu0 %398, %v389
    %v400 = vpop.permute.xlu0 %399
    %403 = vset.pattern.permute.xlu0 0
    %404 = vperm.xlu0 %403, %v390
    %v405 = vpop.permute.xlu0 %404
    %408 = vset.pattern.permute.xlu0 0
    %409 = vperm.xlu0 %408, %v391
    %v410 = vpop.permute.xlu0 %409
    %v412 = vmul.f32 %v384, %v395
    %v413 = vmul.f32 %v385, %v400
    %v414 = vmul.f32 %v386, %v405
    %v415 = vmul.f32 %v387, %v410
    %vm416 = vcmask 64512
    %v417 = vsel %vm416, %v412, 0.0
    %v418 = vsel %vm416, %v413, 0.0
    %v419 = vadd.f32 %v417, %v418
    %v420 = vsel %vm416, %v414, 0.0
    %v421 = vadd.f32 %v419, %v420
    %v422 = vsel %vm416, %v415, 0.0
    %v423 = vadd.f32 %v421, %v422
    %v424 = vrot.slane %v423, 4
    %v425 = vadd.f32 %v423, %v424
    %v426 = vrot.slane %v425, 2
    %v427 = vadd.f32 %v425, %v426
    %v428 = vrot.slane %v427, 1
    %v429 = vadd.f32 %v427, %v428
    %v430 = vld [vmem:[#allocation2] sm:$0x1]
    %432 = vset.pattern.permute.xlu0 0
    %433 = vperm.xlu0 %432, %v430
    %v434 = vpop.permute.xlu0 %433
    %v436 = vlaneseq
    %v437 = vshrl.u32 %v436, 7
    %v438 = vsub.s32 0, %v437
    %v439 = vrot.slane %v434, %v438
    %v440 = vadd.f32 %v429, %v439
    %v441 = vxor.u32 %v440, 2147483648
    %v442 = vmul.f32 %v441, 1.442695
    %v443 = vpow.pop %v442
    %v444 = vadd.f32 %v443, 1.0
    %v445 = vrcp.pop %v444
    %v446 = vmul.f32 1.0, %v445
    %vm447 = vcmask 57344
    %448 = vst.msk [vmem:[#allocation3] sm:$0x1] %vm447, %v446
    // Predicated region
    $region42: #{tpu_custom_call.1} parent=1 // pred_check
      _
    $region43: #{tpu_custom_call.1} parent=1 // pred_check_branch
      %450 = sbr.rel (0) target = $region45
    $region44: #{tpu_custom_call.1} parent=1 // pred_region
      %s452 = ssub.s32 16, 16
      %453 = vsyncadd [#allocation4], %s452
      %s455 = sshll.u32 [#allocation3], 4
      %s456 = int_to_ptr.vmem [resolvable:$true] %s455
      %458 = dma.vmem_to_hbm [thread:$0]  %s456, 16, %s10, [#allocation4]
    $region45: #{tpu_custom_call.1} parent=1 // pred_fallthru
      _
    // Predicated region
    $region46: #{tpu_custom_call.1} parent=1 // pred_check
      _
    $region47: #{tpu_custom_call.1} parent=1 // pred_check_branch
      %460 = sbr.rel (0) target = $region49
    $region48: #{tpu_custom_call.1} parent=1 // pred_region
      %461 = dma.done [#allocation4], 16
    $region49: #{tpu_custom_call.1} parent=1 // pred_fallthru
      _
    %462 = vsyncpa [#allocation4], 1

</llo_original>
